<compile_context>
chip_gen: v7x
topology: tpu7x:2x2x1
jax: 0.10.0
libtpu: 0.0.40
codegen_flags: <defaults>
</compile_context>

<pallas_src>
import functools

import jax
import jax.numpy as jnp
from jax.experimental import pallas as pl
from jax.experimental.pallas import tpu as pltpu


def _round_up(x, m):
    return (x + m - 1) // m * m


def _pick_tile(n_pad, max_tile, min_blocks):
    """Largest multiple-of-128 divisor of n_pad that is <= max_tile and leaves
    at least `min_blocks` grid blocks (falls back to 128)."""
    units = n_pad // 128
    min_blocks = min(min_blocks, units)
    best = 128
    for d in range(1, units + 1):
        if units % d:
            continue
        t = d * 128
        if t <= max_tile and (n_pad // t) >= min_blocks:
            best = max(best, t)
    return best


# ----------------------------------------------------------------------------
# Prologue kernel: one row-tile of M = X @ [W | W_loop]  (f32).
# ----------------------------------------------------------------------------
def _xw_kernel(x_ref, w_ref, m_ref):
    m_ref[...] = jnp.dot(
        x_ref[...], w_ref[...], preferred_element_type=jnp.float32
    ).astype(m_ref.dtype)


# ----------------------------------------------------------------------------
# Main kernel: out[i] += Adj[i, k] @ M_msg[k]; at k == last add the self-loop
# slice of M and the bias.  Output tile (block index (i, 0)) is resident
# across the k reduction, so it doubles as the accumulator.
# ----------------------------------------------------------------------------
def _make_agg_kernel(msg_resident, tile_k):
    def kernel(adj_ref, mmsg_ref, mloop_ref, b_ref, out_ref):
        k = pl.program_id(1)

        @pl.when(k == 0)
        def _():
            out_ref[...] = jnp.zeros_like(out_ref)

        if msg_resident:
            # Whole message matrix lives in VMEM; slice the k-th src block.
            start = pl.multiple_of(k * tile_k, tile_k)
            m_blk = mmsg_ref[pl.ds(start, tile_k), :]
        else:
            m_blk = mmsg_ref[...]

        # Adj is streamed as bf16 (edge counts are exact in bf16); cast in
        # VMEM (cheap VPU op, hidden under the MXU/DMA) and accumulate in f32.
        out_ref[...] += jnp.dot(
            adj_ref[...].astype(jnp.float32), m_blk,
            preferred_element_type=jnp.float32)

        @pl.when(k == pl.num_programs(1) - 1)
        def _():
            out_ref[...] = out_ref[...] + mloop_ref[...] + b_ref[...]

    return kernel


@functools.partial(jax.jit, static_argnames=("tile_m_max", "tile_k_max"))
def rel_graph_conv(adj, x, weight, loop_weight, h_bias, *,
                   tile_m_max=1024, tile_k_max=2048):
    """adj: (N, N) dense adjacency (dst, src); x: (N, in_feat) node features."""
    n, in_feat = x.shape
    out_feat = weight.shape[1]
    out_pad = _round_up(out_feat, 128)          # lane-dense output width
    n_pad = _round_up(n, 128)                   # minimal (8,128)-legal padding

    # dst tile keeps >= 2 blocks when possible (v7x 2-TC parallel axis).
    tile_m = _pick_tile(n_pad, tile_m_max, min_blocks=2)
    tile_k = _pick_tile(n_pad, tile_k_max, min_blocks=1)

    f32 = jnp.float32
    bf16 = jnp.bfloat16

    # Single fused pad + bf16 cast pass over Adj (no pad pass when N is
    # already 128-aligned).  Edge multiplicities are exact in bf16.
    adj_b = adj.astype(bf16)
    x_p = x.astype(f32)
    if n_pad != n:
        adj_b = jnp.pad(adj_b, ((0, n_pad - n), (0, n_pad - n)))
        x_p = jnp.pad(x_p, ((0, n_pad - n), (0, 0)))

    # W_cat columns: [0:out_feat] = W, [out_pad:out_pad+out_feat] = W_loop.
    w_cat = jnp.zeros((in_feat, 2 * out_pad), f32)
    w_cat = w_cat.at[:, :out_feat].set(weight.astype(f32))
    w_cat = w_cat.at[:, out_pad:out_pad + out_feat].set(loop_weight.astype(f32))
    bias_p = jnp.zeros((1, out_pad), f32).at[0, :out_feat].set(
        h_bias.astype(f32))

    # ---- Prologue: M = X @ [W | W_loop]  (f32, small stream) ----------------
    m_all = pl.pallas_call(
        _xw_kernel,
        out_shape=jax.ShapeDtypeStruct((n_pad, 2 * out_pad), f32),
        grid_spec=pltpu.PrefetchScalarGridSpec(
            num_scalar_prefetch=0,
            grid=(n_pad // tile_m,),
            in_specs=[
                pl.BlockSpec((tile_m, in_feat), lambda i: (i, 0)),
                pl.BlockSpec((in_feat, 2 * out_pad), lambda i: (0, 0)),
            ],
            out_specs=pl.BlockSpec((tile_m, 2 * out_pad), lambda i: (i, 0)),
        ),
        compiler_params=pltpu.CompilerParams(
            dimension_semantics=("parallel",)),
    )(x_p, w_cat)

    # Make the message half of M fully VMEM-resident when small enough
    # (budgeted against v7x's 64 MiB VMEM): DMA'd once, re-read never.
    msg_bytes = n_pad * out_pad * 4
    msg_resident = msg_bytes <= (8 << 20)
    if msg_resident:
        mmsg_spec = pl.BlockSpec((n_pad, out_pad), lambda i, k: (0, 0))
        mmsg_vmem = msg_bytes
    else:
        mmsg_spec = pl.BlockSpec((tile_k, out_pad), lambda i, k: (k, 0))
        mmsg_vmem = 2 * tile_k * out_pad * 4

    vmem_need = (2 * tile_m * tile_k * 2        # Adj double buffer (bf16)
                 + mmsg_vmem                    # M_msg
                 + 2 * tile_m * out_pad * 4     # M_loop double buffer
                 + 2 * tile_m * out_pad * 4     # out double buffer
                 + 2 * out_pad * 4)             # bias
    vmem_limit = int(min(max(vmem_need + (8 << 20), 32 << 20), 60 << 20))

    # ---- Main: tiled Adj @ M_msg + M_loop[dst] + bias ------------------------
    grid = (n_pad // tile_m, n_pad // tile_k)
    out_p = pl.pallas_call(
        _make_agg_kernel(msg_resident, tile_k),
        out_shape=jax.ShapeDtypeStruct((n_pad, out_pad), f32),
        grid_spec=pltpu.PrefetchScalarGridSpec(
            num_scalar_prefetch=0,
            grid=grid,
            in_specs=[
                # Adj tile (dst rows, src cols), bf16 stream.
                pl.BlockSpec((tile_m, tile_k), lambda i, k: (i, k)),
                # Message half of M (resident, or streamed over k).
                mmsg_spec,
                # Self-loop half of M for this dst row tile (column block 1).
                pl.BlockSpec((tile_m, out_pad), lambda i, k: (i, 1)),
                # Bias row.
                pl.BlockSpec((1, out_pad), lambda i, k: (0, 0)),
            ],
            out_specs=pl.BlockSpec((tile_m, out_pad), lambda i, k: (i, 0)),
        ),
        compiler_params=pltpu.CompilerParams(
            dimension_semantics=("parallel", "arbitrary"),
            vmem_limit_bytes=vmem_limit),
    )(adj_b, m_all, m_all, bias_p)

    return out_p[:n, :out_feat]


def _xavier_uniform(key, shape, gain):
    fan_in, fan_out = shape
    bound = gain * (6.0 / (fan_in + fan_out)) ** 0.5
    return jax.random.uniform(key, shape, jnp.float32, -bound, bound)


if __name__ == "__main__":
    key = jax.random.PRNGKey(0)
    k_w, k_lw, k_x, k_edges = jax.random.split(key, 4)

    N = 64          # number of nodes
    IN_FEAT = 16
    OUT_FEAT = 32
    N_EDGES = 256

    gain = 2.0 ** 0.5  # calculate_gain('relu')
    weight = _xavier_uniform(k_w, (IN_FEAT, OUT_FEAT), gain)
    loop_weight = _xavier_uniform(k_lw, (IN_FEAT, OUT_FEAT), gain)
    h_bias = jnp.zeros((OUT_FEAT,), jnp.float32)  # nn.init.zeros_

    x = jax.random.normal(k_x, (N, IN_FEAT), jnp.float32)

    # Synthetic random multigraph -> dense adjacency Adj[dst, src] = edge count.
    src = jax.random.randint(k_edges, (N_EDGES,), 0, N)
    dst = jax.random.randint(jax.random.fold_in(k_edges, 1), (N_EDGES,), 0, N)
    adj = jnp.zeros((N, N), jnp.float32).at[dst, src].add(1.0)

    out = rel_graph_conv(adj, x, weight, loop_weight, h_bias)
    out = jax.block_until_ready(out)

    # Plain-JAX reference (same math as the PyTorch forward with defaults).
    ref = adj @ (x @ weight) + h_bias + x @ loop_weight
    assert out.shape == (N, OUT_FEAT)
    assert jnp.allclose(out, ref, atol=1e-4, rtol=1e-4)

    print("KERNEL_OK")
</pallas_src>

<mosaic_0001>
module attributes {stable_mosaic.version = 11 : i64} {
  func.func @_xw_kernel(%arg0: i32, %arg1: memref<128x16xf32, #tpu.memory_space<vmem>>, %arg2: memref<16x256xf32, #tpu.memory_space<vmem>>, %arg3: memref<128x256xf32, #tpu.memory_space<vmem>>) attributes {dimension_semantics = [#tpu.dimension_semantics<parallel>], iteration_bounds = array<i64: 1>, scalar_prefetch = 0 : i64, scratch_operands = 0 : i64, tpu.core_type = #tpu.core_type<tc>, window_params = [{transform_indices = @transform_0, window_bounds = array<i64: 128, 16>}, {pipeline_mode = #tpu.pipeline_mode<synchronous>, transform_indices = @transform_1, window_bounds = array<i64: 16, 256>}, {transform_indices = @transform_2, window_bounds = array<i64: 128, 256>}]} {
    %c0 = arith.constant 0 : index
    %c0_0 = arith.constant 0 : index
    %0 = vector.load %arg1[%c0, %c0_0] : memref<128x16xf32, #tpu.memory_space<vmem>>, vector<128x16xf32>
    %c0_1 = arith.constant 0 : index
    %c0_2 = arith.constant 0 : index
    %1 = vector.load %arg2[%c0_1, %c0_2] : memref<16x256xf32, #tpu.memory_space<vmem>>, vector<16x256xf32>
    %cst = arith.constant dense<0.000000e+00> : vector<128x256xf32>
    %2 = tpu.matmul %0, %1, %cst {dimension_numbers = #tpu.dot_dimension_numbers<[1], [0], [0], [1], [0, 0, 1, 1], [], []>} : vector<128x16xf32>, vector<16x256xf32>, vector<128x256xf32> -> vector<128x256xf32>
    %c0_3 = arith.constant 0 : index
    %c0_4 = arith.constant 0 : index
    %3 = vector.load %arg3[%c0_3, %c0_4] : memref<128x256xf32, #tpu.memory_space<vmem>>, vector<128x256xf32>
    tpu.vector_store %arg3[%c0_3, %c0_4], %2 {strides = array<i32>} : memref<128x256xf32, #tpu.memory_space<vmem>>, vector<128x256xf32>,
    return
  }
  func.func @transform_0(%arg0: i32) -> (i32, i32) {
    %c0_i32 = arith.constant 0 : i32
    %c0_i32_0 = arith.constant 0 : i32
    return %arg0, %c0_i32 : i32, i32
  }
  func.func @transform_1(%arg0: i32) -> (i32, i32) {
    %c0_i32 = arith.constant 0 : i32
    %c0_i32_0 = arith.constant 0 : i32
    %c0_i32_1 = arith.constant 0 : i32
    return %c0_i32, %c0_i32_0 : i32, i32
  }
  func.func @transform_2(%arg0: i32) -> (i32, i32) {
    %c0_i32 = arith.constant 0 : i32
    %c0_i32_0 = arith.constant 0 : i32
    return %arg0, %c0_i32 : i32, i32
  }
}

module attributes {stable_mosaic.version = 11 : i64} {
  func.func @kernel(%arg0: i32, %arg1: i32, %arg2: memref<128x128xbf16, #tpu.memory_space<vmem>>, %arg3: memref<128x128xf32, #tpu.memory_space<vmem>>, %arg4: memref<128x128xf32, #tpu.memory_space<vmem>>, %arg5: memref<1x128xf32, #tpu.memory_space<vmem>>, %arg6: memref<128x128xf32, #tpu.memory_space<vmem>>) attributes {dimension_semantics = [#tpu.dimension_semantics<parallel>, #tpu.dimension_semantics<arbitrary>], iteration_bounds = array<i64: 1, 1>, scalar_prefetch = 0 : i64, scratch_operands = 0 : i64, tpu.core_type = #tpu.core_type<tc>, window_params = [{transform_indices = @transform_0, window_bounds = array<i64: 128, 128>}, {transform_indices = @transform_1, window_bounds = array<i64: 128, 128>}, {transform_indices = @transform_2, window_bounds = array<i64: 128, 128>}, {pipeline_mode = #tpu.pipeline_mode<synchronous>, transform_indices = @transform_3, window_bounds = array<i64: 1, 128>}, {transform_indices = @transform_4, window_bounds = array<i64: 128, 128>}]} {
    %c0_i32 = arith.constant 0 : i32
    %0 = arith.cmpi eq, %arg1, %c0_i32 : i32
    %1 = arith.extui %0 : i1 to i32
    %c0_i32_0 = arith.constant 0 : i32
    %2 = arith.cmpi ne, %1, %c0_i32_0 : i32
    scf.if %2 {
      %cst_9 = arith.constant 0.000000e+00 : f32
      %16 = vector.broadcast %cst_9 : f32 to vector<128x128xf32>
      %c0_10 = arith.constant 0 : index
      %c0_11 = arith.constant 0 : index
      %17 = vector.load %arg6[%c0_10, %c0_11] : memref<128x128xf32, #tpu.memory_space<vmem>>, vector<128x128xf32>
      tpu.vector_store %arg6[%c0_10, %c0_11], %16 {strides = array<i32>} : memref<128x128xf32, #tpu.memory_space<vmem>>, vector<128x128xf32>,
    } else {
    }
    %c128_i32 = arith.constant 128 : i32
    %3 = arith.muli %arg1, %c128_i32 : i32
    %4 = tpu.assume_multiple %3, 128 : i32
    %5 = arith.index_cast %4 : i32 to index
    %c0 = arith.constant 0 : index
    %6 = vector.load %arg3[%5, %c0] : memref<128x128xf32, #tpu.memory_space<vmem>>, vector<128x128xf32>
    %c0_1 = arith.constant 0 : index
    %c0_2 = arith.constant 0 : index
    %7 = vector.load %arg6[%c0_1, %c0_2] : memref<128x128xf32, #tpu.memory_space<vmem>>, vector<128x128xf32>
    %c0_3 = arith.constant 0 : index
    %c0_4 = arith.constant 0 : index
    %8 = vector.load %arg2[%c0_3, %c0_4] : memref<128x128xbf16, #tpu.memory_space<vmem>>, vector<128x128xbf16>
    %9 = arith.extf %8 : vector<128x128xbf16> to vector<128x128xf32>
    %cst = arith.constant dense<0.000000e+00> : vector<128x128xf32>
    %10 = tpu.matmul %9, %6, %cst {dimension_numbers = #tpu.dot_dimension_numbers<[1], [0], [0], [1], [0, 0, 1, 1], [], []>} : vector<128x128xf32>, vector<128x128xf32>, vector<128x128xf32> -> vector<128x128xf32>
    %11 = arith.addf %7, %10 : vector<128x128xf32>
    %c0_5 = arith.constant 0 : index
    %c0_6 = arith.constant 0 : index
    %12 = vector.load %arg6[%c0_5, %c0_6] : memref<128x128xf32, #tpu.memory_space<vmem>>, vector<128x128xf32>
    tpu.vector_store %arg6[%c0_5, %c0_6], %11 {strides = array<i32>} : memref<128x128xf32, #tpu.memory_space<vmem>>, vector<128x128xf32>,
    %c0_i32_7 = arith.constant 0 : i32
    %13 = arith.cmpi eq, %arg1, %c0_i32_7 : i32
    %14 = arith.extui %13 : i1 to i32
    %c0_i32_8 = arith.constant 0 : i32
    %15 = arith.cmpi ne, %14, %c0_i32_8 : i32
    scf.if %15 {
      %c0_9 = arith.constant 0 : index
      %c0_10 = arith.constant 0 : index
      %16 = vector.load %arg6[%c0_9, %c0_10] : memref<128x128xf32, #tpu.memory_space<vmem>>, vector<128x128xf32>
      %c0_11 = arith.constant 0 : index
      %c0_12 = arith.constant 0 : index
      %17 = vector.load %arg4[%c0_11, %c0_12] : memref<128x128xf32, #tpu.memory_space<vmem>>, vector<128x128xf32>
      %18 = arith.addf %16, %17 : vector<128x128xf32>
      %c0_13 = arith.constant 0 : index
      %c0_14 = arith.constant 0 : index
      %19 = vector.load %arg5[%c0_13, %c0_14] : memref<1x128xf32, #tpu.memory_space<vmem>>, vector<1x128xf32>
      %20 = vector.broadcast %19 : vector<1x128xf32> to vector<128x128xf32>
      %21 = arith.addf %18, %20 : vector<128x128xf32>
      %c0_15 = arith.constant 0 : index
      %c0_16 = arith.constant 0 : index
      %22 = vector.load %arg6[%c0_15, %c0_16] : memref<128x128xf32, #tpu.memory_space<vmem>>, vector<128x128xf32>
      tpu.vector_store %arg6[%c0_15, %c0_16], %21 {strides = array<i32>} : memref<128x128xf32, #tpu.memory_space<vmem>>, vector<128x128xf32>,
    } else {
    }
    return
  }
  func.func @transform_0(%arg0: i32, %arg1: i32) -> (i32, i32) {
    %c0_i32 = arith.constant 0 : i32
    return %arg0, %arg1 : i32, i32
  }
  func.func @transform_1(%arg0: i32, %arg1: i32) -> (i32, i32) {
    %c0_i32 = arith.constant 0 : i32
    %c0_i32_0 = arith.constant 0 : i32
    %c0_i32_1 = arith.constant 0 : i32
    return %c0_i32, %c0_i32_0 : i32, i32
  }
  func.func @transform_2(%arg0: i32, %arg1: i32) -> (i32, i32) {
    %c1_i32 = arith.constant 1 : i32
    %c0_i32 = arith.constant 0 : i32
    return %arg0, %c1_i32 : i32, i32
  }
  func.func @transform_3(%arg0: i32, %arg1: i32) -> (i32, i32) {
    %c0_i32 = arith.constant 0 : i32
    %c0_i32_0 = arith.constant 0 : i32
    %c0_i32_1 = arith.constant 0 : i32
    return %c0_i32, %c0_i32_0 : i32, i32
  }
  func.func @transform_4(%arg0: i32, %arg1: i32) -> (i32, i32) {
    %c0_i32 = arith.constant 0 : i32
    %c0_i32_0 = arith.constant 0 : i32
    return %arg0, %c0_i32 : i32, i32
  }
}

</mosaic_0001>

<llo_original>
// kernel: rel_graph_conv.2
$region0: #{rel_graph_conv.2}
  #allocation0 [shape = 'u32[]', space=smem, size = 0x4, offset = 0x4, fixed_abs, tag = 'smem constant byte address 0x4 - core index']
  #allocation1 [shape = 'u32[144,128]{1,0:T(1,128)}', space=vmem, size = 0x12000, scoped, tag = 'internal scratch']
  %s0 = inlined_call_operand.vmem [shape: f32[128,16], index: 0, kind: input, shape index: {}]
  %s1 = inlined_call_operand.vmem [shape: f32[16,256], index: 1, kind: input, shape index: {}]
  %s2 = inlined_call_operand.vmem [shape: f32[128,256], index: 2, kind: output, shape index: {}]
  %s3 = sld [smem:[#allocation0]]
  $region18: #{rel_graph_conv.2} parent=0
    _
  %s5 = ssub.s32 1, %s3
  %s6 = scalar_select 0, %s5, %s3
  // Predicated region
  $region2: #{rel_graph_conv.2} parent=0 // pred_check
    _
  $region3: #{rel_graph_conv.2} parent=0 // pred_check_branch
    %8 = sbr.rel (0) target = $region5
  $region4: #{rel_graph_conv.2} parent=0 // pred_region
    _
  $region5: #{rel_graph_conv.2} parent=0 // pred_fallthru
    _
  // Predicated region
  $region6: #{rel_graph_conv.2} parent=0 // pred_check
    _
  $region7: #{rel_graph_conv.2} parent=0 // pred_check_branch
    %10 = sbr.rel (0) target = $region9
  $region8: #{rel_graph_conv.2} parent=0 // pred_region
    _
  $region9: #{rel_graph_conv.2} parent=0 // pred_fallthru
    _
  %v11 = vld [vmem:[%s0] sm:$0xff]
  %v12 = vld [vmem:[%s0 + $0x8] sm:$0xff]
  %v13 = vld [vmem:[%s0 + $0x10] sm:$0xff]
  %v14 = vld [vmem:[%s0 + $0x18] sm:$0xff]
  %v15 = vld [vmem:[%s0 + $0x20] sm:$0xff]
  %v16 = vld [vmem:[%s0 + $0x28] sm:$0xff]
  %v17 = vld [vmem:[%s0 + $0x30] sm:$0xff]
  %v18 = vld [vmem:[%s0 + $0x38] sm:$0xff]
  %v19 = vld [vmem:[%s0 + $0x40] sm:$0xff]
  %v20 = vld [vmem:[%s0 + $0x48] sm:$0xff]
  %v21 = vld [vmem:[%s0 + $0x50] sm:$0xff]
  %v22 = vld [vmem:[%s0 + $0x58] sm:$0xff]
  %v23 = vld [vmem:[%s0 + $0x60] sm:$0xff]
  %v24 = vld [vmem:[%s0 + $0x68] sm:$0xff]
  %v25 = vld [vmem:[%s0 + $0x70] sm:$0xff]
  %v26 = vld [vmem:[%s0 + $0x78] sm:$0xff]
  %v27 = vld [vmem:[%s1] sm:$0xff]
  %v28 = vld [vmem:[%s1 + $0x8] sm:$0xff]
  %v29 = vld [vmem:[%s1 + $0x10] sm:$0xff]
  %v30 = vld [vmem:[%s1 + $0x18] sm:$0xff]
  %vm31 = vcmask 130048
  %v33 = vsel %vm31, %v11, 0
  %v36 = vsel %vm31, %v12, 0
  %v39 = vsel %vm31, %v13, 0
  %v42 = vsel %vm31, %v14, 0
  %v45 = vsel %vm31, %v15, 0
  %v48 = vsel %vm31, %v16, 0
  %v51 = vsel %vm31, %v17, 0
  %v54 = vsel %vm31, %v18, 0
  %v57 = vsel %vm31, %v19, 0
  %v60 = vsel %vm31, %v20, 0
  %v63 = vsel %vm31, %v21, 0
  %v66 = vsel %vm31, %v22, 0
  %v69 = vsel %vm31, %v23, 0
  %v72 = vsel %vm31, %v24, 0
  %v75 = vsel %vm31, %v25, 0
  %v78 = vsel %vm31, %v26, 0
  %80 = vmatprep.subr.mxu0 %v28
  %81 = vmatpush1.msra.mxu0 %v27
  %82 = vmatprep.subr.mxu0 %v30
  %83 = vmatpush1.msra.mxu0 %v29
  %84 = vmatprep.subr.mxu0 0.0
  %85 = vmatpush1.msra.mxu0 0.0
  %86 = vmatprep.subr.mxu0 0.0
  %87 = vmatpush1.msra.mxu0 0.0
  %88 = vmatprep.subr.mxu0 0.0
  %89 = vmatpush1.msra.mxu0 0.0
  %90 = vmatprep.subr.mxu0 0.0
  %91 = vmatpush1.msra.mxu0 0.0
  %92 = vmatprep.subr.mxu0 0.0
  %93 = vmatpush1.msra.mxu0 0.0
  %94 = vmatprep.subr.mxu0 0.0
  %95 = vmatpush1.msra.mxu0 0.0
  %96 = vmatprep.subr.mxu0 0.0
  %97 = vmatpush1.msra.mxu0 0.0
  %98 = vmatprep.subr.mxu0 0.0
  %99 = vmatpush1.msra.mxu0 0.0
  %100 = vmatprep.subr.mxu0 0.0
  %101 = vmatpush1.msra.mxu0 0.0
  %102 = vmatprep.subr.mxu0 0.0
  %103 = vmatpush1.msra.mxu0 0.0
  %104 = vmatprep.subr.mxu0 0.0
  %105 = vmatpush1.msra.mxu0 0.0
  %106 = vmatprep.subr.mxu0 0.0
  %107 = vmatpush1.msra.mxu0 0.0
  %108 = vmatprep.subr.mxu0 0.0
  %109 = vmatpush1.msra.mxu0 0.0
  %110 = vmatprep.subr.mxu0 0.0
  %111 = vmatpush1.msra.mxu0 0.0
  %112 = vmatprep.subr.mxu0 0.0
  %113 = vmatpush1.msra.mxu0 0.0
  %114 = vmatprep.subr.mxu0 0.0
  %115 = vmatpush1.msra.mxu0 0.0
  %116 = vmatprep.subr.mxu0 0.0
  %117 = vmatpush1.msra.mxu0 0.0
  %118 = vmatprep.subr.mxu0 0.0
  %119 = vmatpush1.msra.mxu0 0.0
  %120 = vmatprep.subr.mxu0 0.0
  %121 = vmatpush1.msra.mxu0 0.0
  %122 = vmatprep.subr.mxu0 0.0
  %123 = vmatpush1.msra.mxu0 0.0
  %124 = vmatprep.subr.mxu0 0.0
  %125 = vmatpush1.msra.mxu0 0.0
  %126 = vmatprep.subr.mxu0 0.0
  %127 = vmatpush1.msra.mxu0 0.0
  %128 = vmatprep.subr.mxu0 0.0
  %129 = vmatpush1.msra.mxu0 0.0
  %130 = vmatprep.subr.mxu0 0.0
  %131 = vmatpush1.msra.mxu0 0.0
  %132 = vmatprep.subr.mxu0 0.0
  %133 = vmatpush1.msra.mxu0 0.0
  %134 = vmatprep.subr.mxu0 0.0
  %135 = vmatpush1.msra.mxu0 0.0
  %136 = vmatprep.subr.mxu0 0.0
  %137 = vmatpush1.msra.mxu0 0.0
  %138 = vmatprep.subr.mxu0 0.0
  %139 = vmatpush1.msra.mxu0 0.0
  %140 = vmatprep.subr.mxu0 0.0
  %141 = vmatpush1.msra.mxu0 0.0
  %142 = vmatprep.subr.mxu0 0.0
  %143 = vmatpush1.msra.mxu0 0.0
  %144 = vmatprep.mubr.f32.mxu0 0.0
  %145 = vmatmul.mubr.f32.gmra.mrb[0].mxu0 %v33
  %v146 = vpop.f32.mrb[0].mxu0
  %v147 = vadd.f32 0.0, %v146
  %v148 = vpop.f32.mrb[0].mxu0
  %v149 = vadd.f32 0.0, %v148
  %150 = vmatprep.mubr.f32.mxu0 0.0
  %151 = vmatmul.mubr.f32.gmra.mrb[0].mxu0 %v36
  %v152 = vpop.f32.mrb[0].mxu0
  %v153 = vadd.f32 0.0, %v152
  %v154 = vpop.f32.mrb[0].mxu0
  %v155 = vadd.f32 0.0, %v154
  %156 = vmatprep.mubr.f32.mxu0 0.0
  %157 = vmatmul.mubr.f32.gmra.mrb[0].mxu0 %v39
  %v158 = vpop.f32.mrb[0].mxu0
  %v159 = vadd.f32 0.0, %v158
  %v160 = vpop.f32.mrb[0].mxu0
  %v161 = vadd.f32 0.0, %v160
  %162 = vmatprep.mubr.f32.mxu0 0.0
  %163 = vmatmul.mubr.f32.gmra.mrb[0].mxu0 %v42
  %v164 = vpop.f32.mrb[0].mxu0
  %v165 = vadd.f32 0.0, %v164
  %v166 = vpop.f32.mrb[0].mxu0
  %v167 = vadd.f32 0.0, %v166
  %168 = vmatprep.mubr.f32.mxu0 0.0
  %169 = vmatmul.mubr.f32.gmra.mrb[0].mxu0 %v45
  %v170 = vpop.f32.mrb[0].mxu0
  %v171 = vadd.f32 0.0, %v170
  %v172 = vpop.f32.mrb[0].mxu0
  %v173 = vadd.f32 0.0, %v172
  %174 = vmatprep.mubr.f32.mxu0 0.0
  %175 = vmatmul.mubr.f32.gmra.mrb[0].mxu0 %v48
  %v176 = vpop.f32.mrb[0].mxu0
  %v177 = vadd.f32 0.0, %v176
  %v178 = vpop.f32.mrb[0].mxu0
  %v179 = vadd.f32 0.0, %v178
  %180 = vmatprep.mubr.f32.mxu0 0.0
  %181 = vmatmul.mubr.f32.gmra.mrb[0].mxu0 %v51
  %v182 = vpop.f32.mrb[0].mxu0
  %v183 = vadd.f32 0.0, %v182
  %v184 = vpop.f32.mrb[0].mxu0
  %v185 = vadd.f32 0.0, %v184
  %186 = vmatprep.mubr.f32.mxu0 0.0
  %187 = vmatmul.mubr.f32.gmra.mrb[0].mxu0 %v54
  %v188 = vpop.f32.mrb[0].mxu0
  %v189 = vadd.f32 0.0, %v188
  %v190 = vpop.f32.mrb[0].mxu0
  %v191 = vadd.f32 0.0, %v190
  %192 = vmatprep.mubr.f32.mxu0 0.0
  %193 = vmatmul.mubr.f32.gmra.mrb[0].mxu0 %v57
  %v194 = vpop.f32.mrb[0].mxu0
  %v195 = vadd.f32 0.0, %v194
  %v196 = vpop.f32.mrb[0].mxu0
  %v197 = vadd.f32 0.0, %v196
  %198 = vmatprep.mubr.f32.mxu0 0.0
  %199 = vmatmul.mubr.f32.gmra.mrb[0].mxu0 %v60
  %v200 = vpop.f32.mrb[0].mxu0
  %v201 = vadd.f32 0.0, %v200
  %v202 = vpop.f32.mrb[0].mxu0
  %v203 = vadd.f32 0.0, %v202
  %204 = vmatprep.mubr.f32.mxu0 0.0
  %205 = vmatmul.mubr.f32.gmra.mrb[0].mxu0 %v63
  %v206 = vpop.f32.mrb[0].mxu0
  %v207 = vadd.f32 0.0, %v206
  %v208 = vpop.f32.mrb[0].mxu0
  %v209 = vadd.f32 0.0, %v208
  %210 = vmatprep.mubr.f32.mxu0 0.0
  %211 = vmatmul.mubr.f32.gmra.mrb[0].mxu0 %v66
  %v212 = vpop.f32.mrb[0].mxu0
  %v213 = vadd.f32 0.0, %v212
  %v214 = vpop.f32.mrb[0].mxu0
  %v215 = vadd.f32 0.0, %v214
  %216 = vmatprep.mubr.f32.mxu0 0.0
  %217 = vmatmul.mubr.f32.gmra.mrb[0].mxu0 %v69
  %v218 = vpop.f32.mrb[0].mxu0
  %v219 = vadd.f32 0.0, %v218
  %v220 = vpop.f32.mrb[0].mxu0
  %v221 = vadd.f32 0.0, %v220
  %222 = vmatprep.mubr.f32.mxu0 0.0
  %223 = vmatmul.mubr.f32.gmra.mrb[0].mxu0 %v72
  %v224 = vpop.f32.mrb[0].mxu0
  %v225 = vadd.f32 0.0, %v224
  %v226 = vpop.f32.mrb[0].mxu0
  %v227 = vadd.f32 0.0, %v226
  %228 = vmatprep.mubr.f32.mxu0 0.0
  %229 = vmatmul.mubr.f32.gmra.mrb[0].mxu0 %v75
  %v230 = vpop.f32.mrb[0].mxu0
  %v231 = vadd.f32 0.0, %v230
  %v232 = vpop.f32.mrb[0].mxu0
  %v233 = vadd.f32 0.0, %v232
  %234 = vmatprep.mubr.f32.mxu0 0.0
  %235 = vmatmul.mubr.f32.gmra.mrb[0].mxu0 %v78
  %v236 = vpop.f32.mrb[0].mxu0
  %v237 = vadd.f32 0.0, %v236
  %v238 = vpop.f32.mrb[0].mxu0
  %v239 = vadd.f32 0.0, %v238
  %240 = vdwg.mxu0
  %241 = vst [vmem:[%s2] sm:$0xff] %v147
  %242 = vst [vmem:[%s2 + $0x8] sm:$0xff] %v149
  %243 = vst [vmem:[%s2 + $0x10] sm:$0xff] %v153
  %244 = vst [vmem:[%s2 + $0x18] sm:$0xff] %v155
  %245 = vst [vmem:[%s2 + $0x20] sm:$0xff] %v159
  %246 = vst [vmem:[%s2 + $0x28] sm:$0xff] %v161
  %247 = vst [vmem:[%s2 + $0x30] sm:$0xff] %v165
  %248 = vst [vmem:[%s2 + $0x38] sm:$0xff] %v167
  %249 = vst [vmem:[%s2 + $0x40] sm:$0xff] %v171
  %250 = vst [vmem:[%s2 + $0x48] sm:$0xff] %v173
  %251 = vst [vmem:[%s2 + $0x50] sm:$0xff] %v177
  %252 = vst [vmem:[%s2 + $0x58] sm:$0xff] %v179
  %253 = vst [vmem:[%s2 + $0x60] sm:$0xff] %v183
  %254 = vst [vmem:[%s2 + $0x68] sm:$0xff] %v185
  %255 = vst [vmem:[%s2 + $0x70] sm:$0xff] %v189
  %256 = vst [vmem:[%s2 + $0x78] sm:$0xff] %v191
  %257 = vst [vmem:[%s2 + $0x80] sm:$0xff] %v195
  %258 = vst [vmem:[%s2 + $0x88] sm:$0xff] %v197
  %259 = vst [vmem:[%s2 + $0x90] sm:$0xff] %v201
  %260 = vst [vmem:[%s2 + $0x98] sm:$0xff] %v203
  %261 = vst [vmem:[%s2 + $0xa0] sm:$0xff] %v207
  %262 = vst [vmem:[%s2 + $0xa8] sm:$0xff] %v209
  %263 = vst [vmem:[%s2 + $0xb0] sm:$0xff] %v213
  %264 = vst [vmem:[%s2 + $0xb8] sm:$0xff] %v215
  %265 = vst [vmem:[%s2 + $0xc0] sm:$0xff] %v219
  %266 = vst [vmem:[%s2 + $0xc8] sm:$0xff] %v221
  %267 = vst [vmem:[%s2 + $0xd0] sm:$0xff] %v225
  %268 = vst [vmem:[%s2 + $0xd8] sm:$0xff] %v227
  %269 = vst [vmem:[%s2 + $0xe0] sm:$0xff] %v231
  %270 = vst [vmem:[%s2 + $0xe8] sm:$0xff] %v233
  %271 = vst [vmem:[%s2 + $0xf0] sm:$0xff] %v237
  %272 = vst [vmem:[%s2 + $0xf8] sm:$0xff] %v239
  // Predicated region
  $region10: #{rel_graph_conv.2} parent=0 // pred_check
    _
  $region11: #{rel_graph_conv.2} parent=0 // pred_check_branch
    %274 = sbr.rel (0) target = $region13
  $region12: #{rel_graph_conv.2} parent=0 // pred_region
    _
  $region13: #{rel_graph_conv.2} parent=0 // pred_fallthru
    _
  // Predicated region
  $region14: #{rel_graph_conv.2} parent=0 // pred_check
    _
  $region15: #{rel_graph_conv.2} parent=0 // pred_check_branch
    %276 = sbr.rel (0) target = $region17
  $region16: #{rel_graph_conv.2} parent=0 // pred_region
    _
  $region17: #{rel_graph_conv.2} parent=0 // pred_fallthru
    _

// kernel: rel_graph_conv.3
$region0: #{rel_graph_conv.3}
  #allocation0 [shape = 'u32[]', space=smem, size = 0x4, offset = 0x4, fixed_abs, tag = 'smem constant byte address 0x4 - core index']
  #allocation1 [shape = 'u32[144,128]{1,0:T(1,128)}', space=vmem, size = 0x12000, scoped, tag = 'internal scratch']
  %s0 = inlined_call_operand.vmem [shape: bf16[128,128], index: 0, kind: input, shape index: {}]
  %s1 = inlined_call_operand.vmem [shape: f32[128,256], index: 1, kind: input, shape index: {}, may-alias: {1,2}]
  %s2 = inlined_call_operand.vmem [shape: f32[128,256], index: 2, kind: input, shape index: {}, may-alias: {1,2}]
  %s3 = inlined_call_operand.vmem [shape: f32[1,128], index: 3, kind: input, shape index: {}]
  %s4 = inlined_call_operand.vmem [shape: f32[128,128], index: 4, kind: output, shape index: {}]
  %s5 = sld [smem:[#allocation0]]
  $region110: #{rel_graph_conv.3} parent=0
    _
  %s7 = ssub.s32 1, %s5
  %s8 = scalar_select 0, %s7, %s5
  $region1: #{rel_graph_conv.3} parent=0
    #allocation2 [shape = 'u8[65536]{0}', space=vmem, size = 0x10000, scoped, tag = 'input window, operand 1, single buffered']
    #allocation3 [shape = 'u8[65536]{0}', space=vmem, size = 0x10000, scoped, tag = 'input window, operand 2, single buffered']
    // Predicated region
    $region2: #{rel_graph_conv.3} parent=1 // pred_check
      _
    $region3: #{rel_graph_conv.3} parent=1 // pred_check_branch
      %10 = sbr.rel (0) target = $region5
    $region4: #{rel_graph_conv.3} parent=1 // pred_region
      _
    $region5: #{rel_graph_conv.3} parent=1 // pred_fallthru
      _
    // Predicated region
    $region6: #{rel_graph_conv.3} parent=1 // pred_check
      _
    $region7: #{rel_graph_conv.3} parent=1 // pred_check_branch
      %12 = sbr.rel (0) target = $region9
    $region8: #{rel_graph_conv.3} parent=1 // pred_region
      // Predicated region
      $region10: #{rel_graph_conv.3} parent=8 // pred_check
        _
      $region11: #{rel_graph_conv.3} parent=8 // pred_check_branch
        %14 = sbr.rel (0) target = $region13
      $region12: #{rel_graph_conv.3} parent=8 // pred_region
        // Predicated region
        $region14: #{rel_graph_conv.3} parent=12 // pred_check
          _
        $region15: #{rel_graph_conv.3} parent=12 // pred_check_branch
          %16 = sbr.rel (0) target = $region17
        $region16: #{rel_graph_conv.3} parent=12 // pred_region
          // Predicated region
          $region29: #{rel_graph_conv.3} parent=16 // pred_check
            _
          $region30: #{rel_graph_conv.3} parent=16 // pred_check_branch
            %61 = sbr.rel (0) target = $region32
          $region31: #{rel_graph_conv.3} parent=16 // pred_region
            loop: start=0, step=1, limit=1
            $region33: #{rel_graph_conv.3} parent=31 // loop_pre_header
              _
            $region34: #{rel_graph_conv.3} parent=31 // loop_header
              %s63 = sphi 0, %s67
              %p64 = scmp.ge.s32.totalorder %s63, 1
              %s68 = sphi %s1, %s1
              %s69 = sphi [#allocation2], [#allocation2]
            $region35: #{rel_graph_conv.3} parent=31 // loop_header_branch
              %66 = sbr.rel (%p64) target = $region39
            $region36: #{rel_graph_conv.3} parent=31 // loop_body
              %v70 = vld [vmem:[%s68] sm:$0xff]
              %71 = vst [vmem:[%s69] sm:$0xff] %v70
              %v72 = vld [vmem:[%s68 + $0x10] sm:$0xff]
              %73 = vst [vmem:[%s69 + $0x8] sm:$0xff] %v72
              %v74 = vld [vmem:[%s68 + $0x20] sm:$0xff]
              %75 = vst [vmem:[%s69 + $0x10] sm:$0xff] %v74
              %v76 = vld [vmem:[%s68 + $0x30] sm:$0xff]
              %77 = vst [vmem:[%s69 + $0x18] sm:$0xff] %v76
              %v78 = vld [vmem:[%s68 + $0x40] sm:$0xff]
              %79 = vst [vmem:[%s69 + $0x20] sm:$0xff] %v78
              %v80 = vld [vmem:[%s68 + $0x50] sm:$0xff]
              %81 = vst [vmem:[%s69 + $0x28] sm:$0xff] %v80
              %v82 = vld [vmem:[%s68 + $0x60] sm:$0xff]
              %83 = vst [vmem:[%s69 + $0x30] sm:$0xff] %v82
              %v84 = vld [vmem:[%s68 + $0x70] sm:$0xff]
              %85 = vst [vmem:[%s69 + $0x38] sm:$0xff] %v84
              %v86 = vld [vmem:[%s68 + $0x80] sm:$0xff]
              %87 = vst [vmem:[%s69 + $0x40] sm:$0xff] %v86
              %v88 = vld [vmem:[%s68 + $0x90] sm:$0xff]
              %89 = vst [vmem:[%s69 + $0x48] sm:$0xff] %v88
              %v90 = vld [vmem:[%s68 + $0xa0] sm:$0xff]
              %91 = vst [vmem:[%s69 + $0x50] sm:$0xff] %v90
              %v92 = vld [vmem:[%s68 + $0xb0] sm:$0xff]
              %93 = vst [vmem:[%s69 + $0x58] sm:$0xff] %v92
              %v94 = vld [vmem:[%s68 + $0xc0] sm:$0xff]
              %95 = vst [vmem:[%s69 + $0x60] sm:$0xff] %v94
              %v96 = vld [vmem:[%s68 + $0xd0] sm:$0xff]
              %97 = vst [vmem:[%s69 + $0x68] sm:$0xff] %v96
              %v98 = vld [vmem:[%s68 + $0xe0] sm:$0xff]
              %99 = vst [vmem:[%s69 + $0x70] sm:$0xff] %v98
              %v100 = vld [vmem:[%s68 + $0xf0] sm:$0xff]
              %101 = vst [vmem:[%s69 + $0x78] sm:$0xff] %v100
            $region37: #{rel_graph_conv.3} parent=31 // loop_footer
              %s67 = sadd.s32 1, %s63
            $region38: #{rel_graph_conv.3} parent=31 // loop_footer_branch
              %62 = sbr.rel target = $region34
            $region39: #{rel_graph_conv.3} parent=31 // loop_exit
              _
          $region32: #{rel_graph_conv.3} parent=16 // pred_fallthru
            _
          // Predicated region
          $region40: #{rel_graph_conv.3} parent=16 // pred_check
            _
          $region41: #{rel_graph_conv.3} parent=16 // pred_check_branch
            %103 = sbr.rel target = $region43
          $region42: #{rel_graph_conv.3} parent=16 // pred_region
            _
          $region43: #{rel_graph_conv.3} parent=16 // pred_fallthru
            _
        $region17: #{rel_graph_conv.3} parent=12 // pred_fallthru
          _
        // Predicated region
        $region18: #{rel_graph_conv.3} parent=12 // pred_check
          _
        $region19: #{rel_graph_conv.3} parent=12 // pred_check_branch
          %18 = sbr.rel target = $region21
        $region20: #{rel_graph_conv.3} parent=12 // pred_region
          loop: start=0, step=1, limit=1
          $region22: #{rel_graph_conv.3} parent=20 // loop_pre_header
            _
          $region23: #{rel_graph_conv.3} parent=20 // loop_header
            %s21 = sphi 0, %s25
            %p22 = scmp.ge.s32.totalorder %s21, 1
            %s26 = sphi %s1, %s1
            %s27 = sphi [#allocation2], [#allocation2]
          $region24: #{rel_graph_conv.3} parent=20 // loop_header_branch
            %24 = sbr.rel (%p22) target = $region28
          $region25: #{rel_graph_conv.3} parent=20 // loop_body
            %v28 = vld [vmem:[%s26] sm:$0xff]
            %29 = vst [vmem:[%s27] sm:$0xff] %v28
            %v30 = vld [vmem:[%s26 + $0x10] sm:$0xff]
            %31 = vst [vmem:[%s27 + $0x8] sm:$0xff] %v30
            %v32 = vld [vmem:[%s26 + $0x20] sm:$0xff]
            %33 = vst [vmem:[%s27 + $0x10] sm:$0xff] %v32
            %v34 = vld [vmem:[%s26 + $0x30] sm:$0xff]
            %35 = vst [vmem:[%s27 + $0x18] sm:$0xff] %v34
            %v36 = vld [vmem:[%s26 + $0x40] sm:$0xff]
            %37 = vst [vmem:[%s27 + $0x20] sm:$0xff] %v36
            %v38 = vld [vmem:[%s26 + $0x50] sm:$0xff]
            %39 = vst [vmem:[%s27 + $0x28] sm:$0xff] %v38
            %v40 = vld [vmem:[%s26 + $0x60] sm:$0xff]
            %41 = vst [vmem:[%s27 + $0x30] sm:$0xff] %v40
            %v42 = vld [vmem:[%s26 + $0x70] sm:$0xff]
            %43 = vst [vmem:[%s27 + $0x38] sm:$0xff] %v42
            %v44 = vld [vmem:[%s26 + $0x80] sm:$0xff]
            %45 = vst [vmem:[%s27 + $0x40] sm:$0xff] %v44
            %v46 = vld [vmem:[%s26 + $0x90] sm:$0xff]
            %47 = vst [vmem:[%s27 + $0x48] sm:$0xff] %v46
            %v48 = vld [vmem:[%s26 + $0xa0] sm:$0xff]
            %49 = vst [vmem:[%s27 + $0x50] sm:$0xff] %v48
            %v50 = vld [vmem:[%s26 + $0xb0] sm:$0xff]
            %51 = vst [vmem:[%s27 + $0x58] sm:$0xff] %v50
            %v52 = vld [vmem:[%s26 + $0xc0] sm:$0xff]
            %53 = vst [vmem:[%s27 + $0x60] sm:$0xff] %v52
            %v54 = vld [vmem:[%s26 + $0xd0] sm:$0xff]
            %55 = vst [vmem:[%s27 + $0x68] sm:$0xff] %v54
            %v56 = vld [vmem:[%s26 + $0xe0] sm:$0xff]
            %57 = vst [vmem:[%s27 + $0x70] sm:$0xff] %v56
            %v58 = vld [vmem:[%s26 + $0xf0] sm:$0xff]
            %59 = vst [vmem:[%s27 + $0x78] sm:$0xff] %v58
          $region26: #{rel_graph_conv.3} parent=20 // loop_footer
            %s25 = sadd.s32 1, %s21
          $region27: #{rel_graph_conv.3} parent=20 // loop_footer_branch
            %20 = sbr.rel target = $region23
          $region28: #{rel_graph_conv.3} parent=20 // loop_exit
            _
        $region21: #{rel_graph_conv.3} parent=12 // pred_fallthru
          _
      $region13: #{rel_graph_conv.3} parent=8 // pred_fallthru
        _
      %104 = vnop
    $region9: #{rel_graph_conv.3} parent=1 // pred_fallthru
      _
    // Predicated region
    $region44: #{rel_graph_conv.3} parent=1 // pred_check
      _
    $region45: #{rel_graph_conv.3} parent=1 // pred_check_branch
      %106 = sbr.rel (0) target = $region47
    $region46: #{rel_graph_conv.3} parent=1 // pred_region
      %s107 = scalar_lea.vmem %s2, 8
      // Predicated region
      $region48: #{rel_graph_conv.3} parent=46 // pred_check
        _
      $region49: #{rel_graph_conv.3} parent=46 // pred_check_branch
        %109 = sbr.rel (0) target = $region51
      $region50: #{rel_graph_conv.3} parent=46 // pred_region
        // Predicated region
        $region52: #{rel_graph_conv.3} parent=50 // pred_check
          _
        $region53: #{rel_graph_conv.3} parent=50 // pred_check_branch
          %111 = sbr.rel (0) target = $region55
        $region54: #{rel_graph_conv.3} parent=50 // pred_region
          // Predicated region
          $region67: #{rel_graph_conv.3} parent=54 // pred_check
            _
          $region68: #{rel_graph_conv.3} parent=54 // pred_check_branch
            %156 = sbr.rel (0) target = $region70
          $region69: #{rel_graph_conv.3} parent=54 // pred_region
            loop: start=0, step=1, limit=1
            $region71: #{rel_graph_conv.3} parent=69 // loop_pre_header
              _
            $region72: #{rel_graph_conv.3} parent=69 // loop_header
              %s158 = sphi 0, %s162
              %p159 = scmp.ge.s32.totalorder %s158, 1
              %s163 = sphi %s107, %s107
              %s164 = sphi [#allocation3], [#allocation3]
            $region73: #{rel_graph_conv.3} parent=69 // loop_header_branch
              %161 = sbr.rel (%p159) target = $region77
            $region74: #{rel_graph_conv.3} parent=69 // loop_body
              %v165 = vld [vmem:[%s163] sm:$0xff]
              %166 = vst [vmem:[%s164] sm:$0xff] %v165
              %v167 = vld [vmem:[%s163 + $0x10] sm:$0xff]
              %168 = vst [vmem:[%s164 + $0x8] sm:$0xff] %v167
              %v169 = vld [vmem:[%s163 + $0x20] sm:$0xff]
              %170 = vst [vmem:[%s164 + $0x10] sm:$0xff] %v169
              %v171 = vld [vmem:[%s163 + $0x30] sm:$0xff]
              %172 = vst [vmem:[%s164 + $0x18] sm:$0xff] %v171
              %v173 = vld [vmem:[%s163 + $0x40] sm:$0xff]
              %174 = vst [vmem:[%s164 + $0x20] sm:$0xff] %v173
              %v175 = vld [vmem:[%s163 + $0x50] sm:$0xff]
              %176 = vst [vmem:[%s164 + $0x28] sm:$0xff] %v175
              %v177 = vld [vmem:[%s163 + $0x60] sm:$0xff]
              %178 = vst [vmem:[%s164 + $0x30] sm:$0xff] %v177
              %v179 = vld [vmem:[%s163 + $0x70] sm:$0xff]
              %180 = vst [vmem:[%s164 + $0x38] sm:$0xff] %v179
              %v181 = vld [vmem:[%s163 + $0x80] sm:$0xff]
              %182 = vst [vmem:[%s164 + $0x40] sm:$0xff] %v181
              %v183 = vld [vmem:[%s163 + $0x90] sm:$0xff]
              %184 = vst [vmem:[%s164 + $0x48] sm:$0xff] %v183
              %v185 = vld [vmem:[%s163 + $0xa0] sm:$0xff]
              %186 = vst [vmem:[%s164 + $0x50] sm:$0xff] %v185
              %v187 = vld [vmem:[%s163 + $0xb0] sm:$0xff]
              %188 = vst [vmem:[%s164 + $0x58] sm:$0xff] %v187
              %v189 = vld [vmem:[%s163 + $0xc0] sm:$0xff]
              %190 = vst [vmem:[%s164 + $0x60] sm:$0xff] %v189
              %v191 = vld [vmem:[%s163 + $0xd0] sm:$0xff]
              %192 = vst [vmem:[%s164 + $0x68] sm:$0xff] %v191
              %v193 = vld [vmem:[%s163 + $0xe0] sm:$0xff]
              %194 = vst [vmem:[%s164 + $0x70] sm:$0xff] %v193
              %v195 = vld [vmem:[%s163 + $0xf0] sm:$0xff]
              %196 = vst [vmem:[%s164 + $0x78] sm:$0xff] %v195
            $region75: #{rel_graph_conv.3} parent=69 // loop_footer
              %s162 = sadd.s32 1, %s158
            $region76: #{rel_graph_conv.3} parent=69 // loop_footer_branch
              %157 = sbr.rel target = $region72
            $region77: #{rel_graph_conv.3} parent=69 // loop_exit
              _
          $region70: #{rel_graph_conv.3} parent=54 // pred_fallthru
            _
          // Predicated region
          $region78: #{rel_graph_conv.3} parent=54 // pred_check
            _
          $region79: #{rel_graph_conv.3} parent=54 // pred_check_branch
            %198 = sbr.rel target = $region81
          $region80: #{rel_graph_conv.3} parent=54 // pred_region
            _
          $region81: #{rel_graph_conv.3} parent=54 // pred_fallthru
            _
        $region55: #{rel_graph_conv.3} parent=50 // pred_fallthru
          _
        // Predicated region
        $region56: #{rel_graph_conv.3} parent=50 // pred_check
          _
        $region57: #{rel_graph_conv.3} parent=50 // pred_check_branch
          %113 = sbr.rel target = $region59
        $region58: #{rel_graph_conv.3} parent=50 // pred_region
          loop: start=0, step=1, limit=1
          $region60: #{rel_graph_conv.3} parent=58 // loop_pre_header
            _
          $region61: #{rel_graph_conv.3} parent=58 // loop_header
            %s116 = sphi 0, %s120
            %p117 = scmp.ge.s32.totalorder %s116, 1
            %s121 = sphi %s107, %s107
            %s122 = sphi [#allocation3], [#allocation3]
          $region62: #{rel_graph_conv.3} parent=58 // loop_header_branch
            %119 = sbr.rel (%p117) target = $region66
          $region63: #{rel_graph_conv.3} parent=58 // loop_body
            %v123 = vld [vmem:[%s121] sm:$0xff]
            %124 = vst [vmem:[%s122] sm:$0xff] %v123
            %v125 = vld [vmem:[%s121 + $0x10] sm:$0xff]
            %126 = vst [vmem:[%s122 + $0x8] sm:$0xff] %v125
            %v127 = vld [vmem:[%s121 + $0x20] sm:$0xff]
            %128 = vst [vmem:[%s122 + $0x10] sm:$0xff] %v127
            %v129 = vld [vmem:[%s121 + $0x30] sm:$0xff]
            %130 = vst [vmem:[%s122 + $0x18] sm:$0xff] %v129
            %v131 = vld [vmem:[%s121 + $0x40] sm:$0xff]
            %132 = vst [vmem:[%s122 + $0x20] sm:$0xff] %v131
            %v133 = vld [vmem:[%s121 + $0x50] sm:$0xff]
            %134 = vst [vmem:[%s122 + $0x28] sm:$0xff] %v133
            %v135 = vld [vmem:[%s121 + $0x60] sm:$0xff]
            %136 = vst [vmem:[%s122 + $0x30] sm:$0xff] %v135
            %v137 = vld [vmem:[%s121 + $0x70] sm:$0xff]
            %138 = vst [vmem:[%s122 + $0x38] sm:$0xff] %v137
            %v139 = vld [vmem:[%s121 + $0x80] sm:$0xff]
            %140 = vst [vmem:[%s122 + $0x40] sm:$0xff] %v139
            %v141 = vld [vmem:[%s121 + $0x90] sm:$0xff]
            %142 = vst [vmem:[%s122 + $0x48] sm:$0xff] %v141
            %v143 = vld [vmem:[%s121 + $0xa0] sm:$0xff]
            %144 = vst [vmem:[%s122 + $0x50] sm:$0xff] %v143
            %v145 = vld [vmem:[%s121 + $0xb0] sm:$0xff]
            %146 = vst [vmem:[%s122 + $0x58] sm:$0xff] %v145
            %v147 = vld [vmem:[%s121 + $0xc0] sm:$0xff]
            %148 = vst [vmem:[%s122 + $0x60] sm:$0xff] %v147
            %v149 = vld [vmem:[%s121 + $0xd0] sm:$0xff]
            %150 = vst [vmem:[%s122 + $0x68] sm:$0xff] %v149
            %v151 = vld [vmem:[%s121 + $0xe0] sm:$0xff]
            %152 = vst [vmem:[%s122 + $0x70] sm:$0xff] %v151
            %v153 = vld [vmem:[%s121 + $0xf0] sm:$0xff]
            %154 = vst [vmem:[%s122 + $0x78] sm:$0xff] %v153
          $region64: #{rel_graph_conv.3} parent=58 // loop_footer
            %s120 = sadd.s32 1, %s116
          $region65: #{rel_graph_conv.3} parent=58 // loop_footer_branch
            %115 = sbr.rel target = $region61
          $region66: #{rel_graph_conv.3} parent=58 // loop_exit
            _
        $region59: #{rel_graph_conv.3} parent=50 // pred_fallthru
          _
      $region51: #{rel_graph_conv.3} parent=46 // pred_fallthru
        _
      %199 = vnop
    $region47: #{rel_graph_conv.3} parent=1 // pred_fallthru
      _
    // Predicated region
    $region82: #{rel_graph_conv.3} parent=1 // pred_check
      _
    $region83: #{rel_graph_conv.3} parent=1 // pred_check_branch
      %201 = sbr.rel (0) target = $region85
    $region84: #{rel_graph_conv.3} parent=1 // pred_region
      _
    $region85: #{rel_graph_conv.3} parent=1 // pred_fallthru
      _
    // Predicated region
    $region86: #{rel_graph_conv.3} parent=1 // pred_check
      _
    $region87: #{rel_graph_conv.3} parent=1 // pred_check_branch
      %203 = sbr.rel (0) target = $region89
    $region88: #{rel_graph_conv.3} parent=1 // pred_region
      _
    $region89: #{rel_graph_conv.3} parent=1 // pred_fallthru
      _
    // Predicated region
    $region90: #{rel_graph_conv.3} parent=1 // pred_check
      _
    $region91: #{rel_graph_conv.3} parent=1 // pred_check_branch
      %205 = sbr.rel (0) target = $region93
    $region92: #{rel_graph_conv.3} parent=1 // pred_region
      _
    $region93: #{rel_graph_conv.3} parent=1 // pred_fallthru
      _
    %p206 = scmp.eq.s32.totalorder 0, 0
    // Predicated region
    $region94: #{rel_graph_conv.3} parent=1 // pred_check
      %p207 = pneg %p206
    $region95: #{rel_graph_conv.3} parent=1 // pred_check_branch
      %209 = sbr.rel (%p207) target = $region97
    $region96: #{rel_graph_conv.3} parent=1 // pred_region
      %210 = vst [vmem:[%s4] sm:$0xff] 0.0
      %211 = vst [vmem:[%s4 + $0x8] sm:$0xff] 0.0
      %212 = vst [vmem:[%s4 + $0x10] sm:$0xff] 0.0
      %213 = vst [vmem:[%s4 + $0x18] sm:$0xff] 0.0
      %214 = vst [vmem:[%s4 + $0x20] sm:$0xff] 0.0
      %215 = vst [vmem:[%s4 + $0x28] sm:$0xff] 0.0
      %216 = vst [vmem:[%s4 + $0x30] sm:$0xff] 0.0
      %217 = vst [vmem:[%s4 + $0x38] sm:$0xff] 0.0
      %218 = vst [vmem:[%s4 + $0x40] sm:$0xff] 0.0
      %219 = vst [vmem:[%s4 + $0x48] sm:$0xff] 0.0
      %220 = vst [vmem:[%s4 + $0x50] sm:$0xff] 0.0
      %221 = vst [vmem:[%s4 + $0x58] sm:$0xff] 0.0
      %222 = vst [vmem:[%s4 + $0x60] sm:$0xff] 0.0
      %223 = vst [vmem:[%s4 + $0x68] sm:$0xff] 0.0
      %224 = vst [vmem:[%s4 + $0x70] sm:$0xff] 0.0
      %225 = vst [vmem:[%s4 + $0x78] sm:$0xff] 0.0
    $region97: #{rel_graph_conv.3} parent=1 // pred_fallthru
      _
    %s226 = smul.u32 0, 128
    %s227 = scalar_lea.vmem [#allocation2], %s226
    %v228 = vld [vmem:[%s227] sm:$0xff]
    %v229 = vld [vmem:[%s227 + $0x8] sm:$0xff]
    %v230 = vld [vmem:[%s227 + $0x10] sm:$0xff]
    %v231 = vld [vmem:[%s227 + $0x18] sm:$0xff]
    %v232 = vld [vmem:[%s227 + $0x20] sm:$0xff]
    %v233 = vld [vmem:[%s227 + $0x28] sm:$0xff]
    %v234 = vld [vmem:[%s227 + $0x30] sm:$0xff]
    %v235 = vld [vmem:[%s227 + $0x38] sm:$0xff]
    %v236 = vld [vmem:[%s227 + $0x40] sm:$0xff]
    %v237 = vld [vmem:[%s227 + $0x48] sm:$0xff]
    %v238 = vld [vmem:[%s227 + $0x50] sm:$0xff]
    %v239 = vld [vmem:[%s227 + $0x58] sm:$0xff]
    %v240 = vld [vmem:[%s227 + $0x60] sm:$0xff]
    %v241 = vld [vmem:[%s227 + $0x68] sm:$0xff]
    %v242 = vld [vmem:[%s227 + $0x70] sm:$0xff]
    %v243 = vld [vmem:[%s227 + $0x78] sm:$0xff]
    %v244 = vld [vmem:[%s4] sm:$0xff]
    %v245 = vld [vmem:[%s4 + $0x8] sm:$0xff]
    %v246 = vld [vmem:[%s4 + $0x10] sm:$0xff]
    %v247 = vld [vmem:[%s4 + $0x18] sm:$0xff]
    %v248 = vld [vmem:[%s4 + $0x20] sm:$0xff]
    %v249 = vld [vmem:[%s4 + $0x28] sm:$0xff]
    %v250 = vld [vmem:[%s4 + $0x30] sm:$0xff]
    %v251 = vld [vmem:[%s4 + $0x38] sm:$0xff]
    %v252 = vld [vmem:[%s4 + $0x40] sm:$0xff]
    %v253 = vld [vmem:[%s4 + $0x48] sm:$0xff]
    %v254 = vld [vmem:[%s4 + $0x50] sm:$0xff]
    %v255 = vld [vmem:[%s4 + $0x58] sm:$0xff]
    %v256 = vld [vmem:[%s4 + $0x60] sm:$0xff]
    %v257 = vld [vmem:[%s4 + $0x68] sm:$0xff]
    %v258 = vld [vmem:[%s4 + $0x70] sm:$0xff]
    %v259 = vld [vmem:[%s4 + $0x78] sm:$0xff]
    %v260 = vld [vmem:[%s0] sm:$0xf]
    %v261 = vld [vmem:[%s0 + $0x4] sm:$0xf]
    %v262 = vld [vmem:[%s0 + $0x8] sm:$0xf]
    %v263 = vld [vmem:[%s0 + $0xc] sm:$0xf]
    %v264 = vld [vmem:[%s0 + $0x10] sm:$0xf]
    %v265 = vld [vmem:[%s0 + $0x14] sm:$0xf]
    %v266 = vld [vmem:[%s0 + $0x18] sm:$0xf]
    %v267 = vld [vmem:[%s0 + $0x1c] sm:$0xf]
    %v268 = vld [vmem:[%s0 + $0x20] sm:$0xf]
    %v269 = vld [vmem:[%s0 + $0x24] sm:$0xf]
    %v270 = vld [vmem:[%s0 + $0x28] sm:$0xf]
    %v271 = vld [vmem:[%s0 + $0x2c] sm:$0xf]
    %v272 = vld [vmem:[%s0 + $0x30] sm:$0xf]
    %v273 = vld [vmem:[%s0 + $0x34] sm:$0xf]
    %v274 = vld [vmem:[%s0 + $0x38] sm:$0xf]
    %v275 = vld [vmem:[%s0 + $0x3c] sm:$0xf]
    %v276 = vunpack.c.l.bf16 %v260
    %v277 = vunpack.c.l.bf16 %v261
    %v278 = vunpack.c.l.bf16 %v262
    %v279 = vunpack.c.l.bf16 %v263
    %v280 = vunpack.c.l.bf16 %v264
    %v281 = vunpack.c.l.bf16 %v265
    %v282 = vunpack.c.l.bf16 %v266
    %v283 = vunpack.c.l.bf16 %v267
    %v284 = vunpack.c.l.bf16 %v268
    %v285 = vunpack.c.l.bf16 %v269
    %v286 = vunpack.c.l.bf16 %v270
    %v287 = vunpack.c.l.bf16 %v271
    %v288 = vunpack.c.l.bf16 %v272
    %v289 = vunpack.c.l.bf16 %v273
    %v290 = vunpack.c.l.bf16 %v274
    %v291 = vunpack.c.l.bf16 %v275
    %292 = vmatprep.subr.mxu0 0.0
    %293 = vmatpush1.msra.mxu0 %v228
    %294 = vmatprep.subr.mxu0 0.0
    %295 = vmatpush1.msra.mxu0 %v229
    %296 = vmatprep.subr.mxu0 0.0
    %297 = vmatpush1.msra.mxu0 %v230
    %298 = vmatprep.subr.mxu0 0.0
    %299 = vmatpush1.msra.mxu0 %v231
    %300 = vmatprep.subr.mxu0 0.0
    %301 = vmatpush1.msra.mxu0 %v232
    %302 = vmatprep.subr.mxu0 0.0
    %303 = vmatpush1.msra.mxu0 %v233
    %304 = vmatprep.subr.mxu0 0.0
    %305 = vmatpush1.msra.mxu0 %v234
    %306 = vmatprep.subr.mxu0 0.0
    %307 = vmatpush1.msra.mxu0 %v235
    %308 = vmatprep.subr.mxu0 0.0
    %309 = vmatpush1.msra.mxu0 %v236
    %310 = vmatprep.subr.mxu0 0.0
    %311 = vmatpush1.msra.mxu0 %v237
    %312 = vmatprep.subr.mxu0 0.0
    %313 = vmatpush1.msra.mxu0 %v238
    %314 = vmatprep.subr.mxu0 0.0
    %315 = vmatpush1.msra.mxu0 %v239
    %316 = vmatprep.subr.mxu0 0.0
    %317 = vmatpush1.msra.mxu0 %v240
    %318 = vmatprep.subr.mxu0 0.0
    %319 = vmatpush1.msra.mxu0 %v241
    %320 = vmatprep.subr.mxu0 0.0
    %321 = vmatpush1.msra.mxu0 %v242
    %322 = vmatprep.subr.mxu0 0.0
    %323 = vmatpush1.msra.mxu0 %v243
    %324 = vmatprep.subr.mxu0 0.0
    %325 = vmatpush1.msra.mxu0 0.0
    %326 = vmatprep.subr.mxu0 0.0
    %327 = vmatpush1.msra.mxu0 0.0
    %328 = vmatprep.subr.mxu0 0.0
    %329 = vmatpush1.msra.mxu0 0.0
    %330 = vmatprep.subr.mxu0 0.0
    %331 = vmatpush1.msra.mxu0 0.0
    %332 = vmatprep.subr.mxu0 0.0
    %333 = vmatpush1.msra.mxu0 0.0
    %334 = vmatprep.subr.mxu0 0.0
    %335 = vmatpush1.msra.mxu0 0.0
    %336 = vmatprep.subr.mxu0 0.0
    %337 = vmatpush1.msra.mxu0 0.0
    %338 = vmatprep.subr.mxu0 0.0
    %339 = vmatpush1.msra.mxu0 0.0
    %340 = vmatprep.subr.mxu0 0.0
    %341 = vmatpush1.msra.mxu0 0.0
    %342 = vmatprep.subr.mxu0 0.0
    %343 = vmatpush1.msra.mxu0 0.0
    %344 = vmatprep.subr.mxu0 0.0
    %345 = vmatpush1.msra.mxu0 0.0
    %346 = vmatprep.subr.mxu0 0.0
    %347 = vmatpush1.msra.mxu0 0.0
    %348 = vmatprep.subr.mxu0 0.0
    %349 = vmatpush1.msra.mxu0 0.0
    %350 = vmatprep.subr.mxu0 0.0
    %351 = vmatpush1.msra.mxu0 0.0
    %352 = vmatprep.subr.mxu0 0.0
    %353 = vmatpush1.msra.mxu0 0.0
    %354 = vmatprep.subr.mxu0 0.0
    %355 = vmatpush1.msra.mxu0 0.0
    %356 = vmatprep.mubr.f32.mxu0 0.0
    %357 = vmatmul.mubr.f32.gmra.mrb[0].mxu0 %v276
    %v358 = vpop.f32.mrb[0].mxu0
    %v359 = vadd.f32 0.0, %v358
    %v360 = vpop.f32.mrb[0].mxu0
    %361 = vmatprep.mubr.f32.mxu0 0.0
    %362 = vmatmul.mubr.f32.gmra.mrb[0].mxu0 %v277
    %v363 = vpop.f32.mrb[0].mxu0
    %v364 = vadd.f32 0.0, %v363
    %v365 = vpop.f32.mrb[0].mxu0
    %366 = vmatprep.mubr.f32.mxu0 0.0
    %367 = vmatmul.mubr.f32.gmra.mrb[0].mxu0 %v278
    %v368 = vpop.f32.mrb[0].mxu0
    %v369 = vadd.f32 0.0, %v368
    %v370 = vpop.f32.mrb[0].mxu0
    %371 = vmatprep.mubr.f32.mxu0 0.0
    %372 = vmatmul.mubr.f32.gmra.mrb[0].mxu0 %v279
    %v373 = vpop.f32.mrb[0].mxu0
    %v374 = vadd.f32 0.0, %v373
    %v375 = vpop.f32.mrb[0].mxu0
    %376 = vmatprep.mubr.f32.mxu0 0.0
    %377 = vmatmul.mubr.f32.gmra.mrb[0].mxu0 %v280
    %v378 = vpop.f32.mrb[0].mxu0
    %v379 = vadd.f32 0.0, %v378
    %v380 = vpop.f32.mrb[0].mxu0
    %381 = vmatprep.mubr.f32.mxu0 0.0
    %382 = vmatmul.mubr.f32.gmra.mrb[0].mxu0 %v281
    %v383 = vpop.f32.mrb[0].mxu0
    %v384 = vadd.f32 0.0, %v383
    %v385 = vpop.f32.mrb[0].mxu0
    %386 = vmatprep.mubr.f32.mxu0 0.0
    %387 = vmatmul.mubr.f32.gmra.mrb[0].mxu0 %v282
    %v388 = vpop.f32.mrb[0].mxu0
    %v389 = vadd.f32 0.0, %v388
    %v390 = vpop.f32.mrb[0].mxu0
    %391 = vmatprep.mubr.f32.mxu0 0.0
    %392 = vmatmul.mubr.f32.gmra.mrb[0].mxu0 %v283
    %v393 = vpop.f32.mrb[0].mxu0
    %v394 = vadd.f32 0.0, %v393
    %v395 = vpop.f32.mrb[0].mxu0
    %396 = vmatprep.mubr.f32.mxu0 0.0
    %397 = vmatmul.mubr.f32.gmra.mrb[0].mxu0 %v284
    %v398 = vpop.f32.mrb[0].mxu0
    %v399 = vadd.f32 0.0, %v398
    %v400 = vpop.f32.mrb[0].mxu0
    %401 = vmatprep.mubr.f32.mxu0 0.0
    %402 = vmatmul.mubr.f32.gmra.mrb[0].mxu0 %v285
    %v403 = vpop.f32.mrb[0].mxu0
    %v404 = vadd.f32 0.0, %v403
    %v405 = vpop.f32.mrb[0].mxu0
    %406 = vmatprep.mubr.f32.mxu0 0.0
    %407 = vmatmul.mubr.f32.gmra.mrb[0].mxu0 %v286
    %v408 = vpop.f32.mrb[0].mxu0
    %v409 = vadd.f32 0.0, %v408
    %v410 = vpop.f32.mrb[0].mxu0
    %411 = vmatprep.mubr.f32.mxu0 0.0
    %412 = vmatmul.mubr.f32.gmra.mrb[0].mxu0 %v287
    %v413 = vpop.f32.mrb[0].mxu0
    %v414 = vadd.f32 0.0, %v413
    %v415 = vpop.f32.mrb[0].mxu0
    %416 = vmatprep.mubr.f32.mxu0 0.0
    %417 = vmatmul.mubr.f32.gmra.mrb[0].mxu0 %v288
    %v418 = vpop.f32.mrb[0].mxu0
    %v419 = vadd.f32 0.0, %v418
    %v420 = vpop.f32.mrb[0].mxu0
    %421 = vmatprep.mubr.f32.mxu0 0.0
    %422 = vmatmul.mubr.f32.gmra.mrb[0].mxu0 %v289
    %v423 = vpop.f32.mrb[0].mxu0
    %v424 = vadd.f32 0.0, %v423
    %v425 = vpop.f32.mrb[0].mxu0
    %426 = vmatprep.mubr.f32.mxu0 0.0
    %427 = vmatmul.mubr.f32.gmra.mrb[0].mxu0 %v290
    %v428 = vpop.f32.mrb[0].mxu0
    %v429 = vadd.f32 0.0, %v428
    %v430 = vpop.f32.mrb[0].mxu0
    %431 = vmatprep.mubr.f32.mxu0 0.0
    %432 = vmatmul.mubr.f32.gmra.mrb[0].mxu0 %v291
    %v433 = vpop.f32.mrb[0].mxu0
    %v434 = vadd.f32 0.0, %v433
    %v435 = vpop.f32.mrb[0].mxu0
    %436 = vdwg.mxu0
    %v437 = vadd.f32 %v244, %v359
    %v438 = vadd.f32 %v245, %v364
    %v439 = vadd.f32 %v246, %v369
    %v440 = vadd.f32 %v247, %v374
    %v441 = vadd.f32 %v248, %v379
    %v442 = vadd.f32 %v249, %v384
    %v443 = vadd.f32 %v250, %v389
    %v444 = vadd.f32 %v251, %v394
    %v445 = vadd.f32 %v252, %v399
    %v446 = vadd.f32 %v253, %v404
    %v447 = vadd.f32 %v254, %v409
    %v448 = vadd.f32 %v255, %v414
    %v449 = vadd.f32 %v256, %v419
    %v450 = vadd.f32 %v257, %v424
    %v451 = vadd.f32 %v258, %v429
    %v452 = vadd.f32 %v259, %v434
    %453 = vst [vmem:[%s4] sm:$0xff] %v437
    %454 = vst [vmem:[%s4 + $0x8] sm:$0xff] %v438
    %455 = vst [vmem:[%s4 + $0x10] sm:$0xff] %v439
    %456 = vst [vmem:[%s4 + $0x18] sm:$0xff] %v440
    %457 = vst [vmem:[%s4 + $0x20] sm:$0xff] %v441
    %458 = vst [vmem:[%s4 + $0x28] sm:$0xff] %v442
    %459 = vst [vmem:[%s4 + $0x30] sm:$0xff] %v443
    %460 = vst [vmem:[%s4 + $0x38] sm:$0xff] %v444
    %461 = vst [vmem:[%s4 + $0x40] sm:$0xff] %v445
    %462 = vst [vmem:[%s4 + $0x48] sm:$0xff] %v446
    %463 = vst [vmem:[%s4 + $0x50] sm:$0xff] %v447
    %464 = vst [vmem:[%s4 + $0x58] sm:$0xff] %v448
    %465 = vst [vmem:[%s4 + $0x60] sm:$0xff] %v449
    %466 = vst [vmem:[%s4 + $0x68] sm:$0xff] %v450
    %467 = vst [vmem:[%s4 + $0x70] sm:$0xff] %v451
    %468 = vst [vmem:[%s4 + $0x78] sm:$0xff] %v452
    // Predicated region
    $region98: #{rel_graph_conv.3} parent=1 // pred_check
      %p469 = pneg %p206
    $region99: #{rel_graph_conv.3} parent=1 // pred_check_branch
      %471 = sbr.rel (%p469) target = $region101
    $region100: #{rel_graph_conv.3} parent=1 // pred_region
      %v472 = vld [vmem:[%s4] sm:$0xff]
      %v473 = vld [vmem:[%s4 + $0x8] sm:$0xff]
      %v474 = vld [vmem:[%s4 + $0x10] sm:$0xff]
      %v475 = vld [vmem:[%s4 + $0x18] sm:$0xff]
      %v476 = vld [vmem:[%s4 + $0x20] sm:$0xff]
      %v477 = vld [vmem:[%s4 + $0x28] sm:$0xff]
      %v478 = vld [vmem:[%s4 + $0x30] sm:$0xff]
      %v479 = vld [vmem:[%s4 + $0x38] sm:$0xff]
      %v480 = vld [vmem:[%s4 + $0x40] sm:$0xff]
      %v481 = vld [vmem:[%s4 + $0x48] sm:$0xff]
      %v482 = vld [vmem:[%s4 + $0x50] sm:$0xff]
      %v483 = vld [vmem:[%s4 + $0x58] sm:$0xff]
      %v484 = vld [vmem:[%s4 + $0x60] sm:$0xff]
      %v485 = vld [vmem:[%s4 + $0x68] sm:$0xff]
      %v486 = vld [vmem:[%s4 + $0x70] sm:$0xff]
      %v487 = vld [vmem:[%s4 + $0x78] sm:$0xff]
      %v488 = vld [vmem:[#allocation3] sm:$0xff]
      %v489 = vld [vmem:[#allocation3 + $0x8] sm:$0xff]
      %v490 = vld [vmem:[#allocation3 + $0x10] sm:$0xff]
      %v491 = vld [vmem:[#allocation3 + $0x18] sm:$0xff]
      %v492 = vld [vmem:[#allocation3 + $0x20] sm:$0xff]
      %v493 = vld [vmem:[#allocation3 + $0x28] sm:$0xff]
      %v494 = vld [vmem:[#allocation3 + $0x30] sm:$0xff]
      %v495 = vld [vmem:[#allocation3 + $0x38] sm:$0xff]
      %v496 = vld [vmem:[#allocation3 + $0x40] sm:$0xff]
      %v497 = vld [vmem:[#allocation3 + $0x48] sm:$0xff]
      %v498 = vld [vmem:[#allocation3 + $0x50] sm:$0xff]
      %v499 = vld [vmem:[#allocation3 + $0x58] sm:$0xff]
      %v500 = vld [vmem:[#allocation3 + $0x60] sm:$0xff]
      %v501 = vld [vmem:[#allocation3 + $0x68] sm:$0xff]
      %v502 = vld [vmem:[#allocation3 + $0x70] sm:$0xff]
      %v503 = vld [vmem:[#allocation3 + $0x78] sm:$0xff]
      %v504 = vadd.f32 %v472, %v488
      %v505 = vadd.f32 %v473, %v489
      %v506 = vadd.f32 %v474, %v490
      %v507 = vadd.f32 %v475, %v491
      %v508 = vadd.f32 %v476, %v492
      %v509 = vadd.f32 %v477, %v493
      %v510 = vadd.f32 %v478, %v494
      %v511 = vadd.f32 %v479, %v495
      %v512 = vadd.f32 %v480, %v496
      %v513 = vadd.f32 %v481, %v497
      %v514 = vadd.f32 %v482, %v498
      %v515 = vadd.f32 %v483, %v499
      %v516 = vadd.f32 %v484, %v500
      %v517 = vadd.f32 %v485, %v501
      %v518 = vadd.f32 %v486, %v502
      %v519 = vadd.f32 %v487, %v503
      %v520 = vld [vmem:[%s3] sm:$0x1]
      %v522 = vlaneseq
      %v523 = vshrl.u32 %v522, 7
      %v524 = vsub.s32 0, %v523
      %v525 = vrot.slane %v520, %v524
      %v527 = vadd.f32 %v504, %v525
      %v528 = vadd.f32 %v505, %v525
      %v529 = vadd.f32 %v506, %v525
      %v530 = vadd.f32 %v507, %v525
      %v531 = vadd.f32 %v508, %v525
      %v532 = vadd.f32 %v509, %v525
      %v533 = vadd.f32 %v510, %v525
      %v534 = vadd.f32 %v511, %v525
      %v535 = vadd.f32 %v512, %v525
      %v536 = vadd.f32 %v513, %v525
      %v537 = vadd.f32 %v514, %v525
      %v538 = vadd.f32 %v515, %v525
      %v539 = vadd.f32 %v516, %v525
      %v540 = vadd.f32 %v517, %v525
      %v541 = vadd.f32 %v518, %v525
      %v542 = vadd.f32 %v519, %v525
      %543 = vst [vmem:[%s4] sm:$0xff] %v527
      %544 = vst [vmem:[%s4 + $0x8] sm:$0xff] %v528
      %545 = vst [vmem:[%s4 + $0x10] sm:$0xff] %v529
      %546 = vst [vmem:[%s4 + $0x18] sm:$0xff] %v530
      %547 = vst [vmem:[%s4 + $0x20] sm:$0xff] %v531
      %548 = vst [vmem:[%s4 + $0x28] sm:$0xff] %v532
      %549 = vst [vmem:[%s4 + $0x30] sm:$0xff] %v533
      %550 = vst [vmem:[%s4 + $0x38] sm:$0xff] %v534
      %551 = vst [vmem:[%s4 + $0x40] sm:$0xff] %v535
      %552 = vst [vmem:[%s4 + $0x48] sm:$0xff] %v536
      %553 = vst [vmem:[%s4 + $0x50] sm:$0xff] %v537
      %554 = vst [vmem:[%s4 + $0x58] sm:$0xff] %v538
      %555 = vst [vmem:[%s4 + $0x60] sm:$0xff] %v539
      %556 = vst [vmem:[%s4 + $0x68] sm:$0xff] %v540
      %557 = vst [vmem:[%s4 + $0x70] sm:$0xff] %v541
      %558 = vst [vmem:[%s4 + $0x78] sm:$0xff] %v542
    $region101: #{rel_graph_conv.3} parent=1 // pred_fallthru
      _
    // Predicated region
    $region102: #{rel_graph_conv.3} parent=1 // pred_check
      _
    $region103: #{rel_graph_conv.3} parent=1 // pred_check_branch
      %560 = sbr.rel (0) target = $region105
    $region104: #{rel_graph_conv.3} parent=1 // pred_region
      _
    $region105: #{rel_graph_conv.3} parent=1 // pred_fallthru
      _
    // Predicated region
    $region106: #{rel_graph_conv.3} parent=1 // pred_check
      _
    $region107: #{rel_graph_conv.3} parent=1 // pred_check_branch
      %562 = sbr.rel (0) target = $region109
    $region108: #{rel_graph_conv.3} parent=1 // pred_region
      _
    $region109: #{rel_graph_conv.3} parent=1 // pred_fallthru
      _

</llo_original>
